<compile_context>
chip_gen: v6e
topology: v6e:2x2x1
jax: 0.10.0
libtpu: 0.0.40
codegen_flags: <defaults>
</compile_context>

<pallas_src>
import math
import functools

import jax
import jax.numpy as jnp
from jax.experimental import pallas as pl
from jax.experimental.pallas import tpu as pltpu

_HIGHEST = jax.lax.Precision.HIGHEST


def _round_up(x, m):
    return ((x + m - 1) // m) * m


def _vmem_limit_bytes():
    # Generation-dependent scoped-VMEM budget: ~3/4 of physical capacity,
    # capped at 96 MiB on 128-MiB parts (v5e/v6e); the 48 MiB fallback is safe
    # on every generation including v7x (64 MiB physical).
    try:
        cap = pltpu.get_tpu_info().vmem_capacity_bytes
    except Exception:  # conservative fallback if the query is unavailable
        return 48 * 1024 * 1024
    return min(96 * 1024 * 1024, cap * 3 // 4)


# ----------------------------------------------------------------------------
# Fused QKV projection:  x(B*N, C) @ W(C, 3C) + b  ->  Q*scale, K (f32), V (bf16)
# ----------------------------------------------------------------------------
def _qkv_proj_kernel(x_ref, w_ref, b_ref, q_ref, k_ref, v_ref, *, scale):
    # Q/K feed the tie-sensitive top-k selection: true-fp32 MXU (HIGHEST).
    y = jnp.dot(x_ref[...], w_ref[...], precision=_HIGHEST,
                preferred_element_type=jnp.float32)
    y = y + b_ref[...]
    c = q_ref.shape[-1]
    # Scale folded into Q here (saves the N^2 per-head scaling downstream).
    q_ref[...] = (y[:, :c] * scale).astype(q_ref.dtype)
    k_ref[...] = y[:, c:2 * c].astype(k_ref.dtype)
    v_ref[...] = y[:, 2 * c:].astype(v_ref.dtype)          # bf16 at the boundary


def qkv_projection(x2d, w, b, *, scale, tile_m=512):
    # TODO(synk): for large d_model, tile the 3C weight columns (and/or K with
    # an fp32 accumulator scratch) instead of keeping the full (C,3C) weight
    # resident in VMEM.
    m, c_in = x2d.shape
    c = w.shape[1] // 3
    tm = min(tile_m, _round_up(m, 8))

    o_spec = pl.BlockSpec((tm, c), lambda i: (i, 0))
    kernel = functools.partial(_qkv_proj_kernel, scale=scale)
    return pl.pallas_call(
        kernel,
        grid=(pl.cdiv(m, tm),),          # partial edge block handled by Pallas
        in_specs=[pl.BlockSpec((tm, c_in), lambda i: (i, 0)),
                  pl.BlockSpec((c_in, 3 * c), lambda i: (0, 0)),
                  pl.BlockSpec((1, 3 * c), lambda i: (0, 0))],
        out_specs=[o_spec, o_spec, o_spec],
        out_shape=[jax.ShapeDtypeStruct((m, c), jnp.float32),    # Q (pre-scaled)
                   jax.ShapeDtypeStruct((m, c), jnp.float32),    # K
                   jax.ShapeDtypeStruct((m, c), jnp.bfloat16)],  # V
        compiler_params=pltpu.CompilerParams(
            dimension_semantics=("parallel",),
            vmem_limit_bytes=_vmem_limit_bytes()),
    )(x2d, w, b)


# ----------------------------------------------------------------------------
# Output projection:  y = x @ W + b   (bf16 MXU inputs, fp32 accumulate)
# ----------------------------------------------------------------------------
def _out_proj_kernel(x_ref, w_ref, b_ref, o_ref):
    x = x_ref[...].astype(jnp.bfloat16)
    w = w_ref[...].astype(jnp.bfloat16)
    o_ref[...] = jnp.dot(x, w, preferred_element_type=jnp.float32) + b_ref[...]


def out_projection(x2d, w, b, *, tile_m=512):
    m, c_in = x2d.shape
    c_out = w.shape[1]
    tm = min(tile_m, _round_up(m, 8))
    return pl.pallas_call(
        _out_proj_kernel,
        grid=(pl.cdiv(m, tm),),
        in_specs=[pl.BlockSpec((tm, c_in), lambda i: (i, 0)),
                  pl.BlockSpec((c_in, c_out), lambda i: (0, 0)),
                  pl.BlockSpec((1, c_out), lambda i: (0, 0))],
        out_specs=pl.BlockSpec((tm, c_out), lambda i: (i, 0)),
        out_shape=jax.ShapeDtypeStruct((m, c_out), jnp.float32),
        compiler_params=pltpu.CompilerParams(
            dimension_semantics=("parallel",),
            vmem_limit_bytes=_vmem_limit_bytes()),
    )(x2d, w, b)


# ----------------------------------------------------------------------------
# Prob-sparse attention: one program per (batch, head-group).
# ----------------------------------------------------------------------------
def _prob_sparse_attn_kernel(q_ref, k_ref, v_ref, o_ref, *,
                             n_top, heads_per_blk, d_k):
    n = q_ref.shape[0]

    # -------- head-invariant rank machinery, hoisted out of the head loop ----
    ii = jax.lax.broadcasted_iota(jnp.int32, (n, n), 0)
    jj = jax.lax.broadcasted_iota(jnp.int32, (n, n), 1)
    tie_lower = jj < ii                        # lower index wins ties (topk)
    ones_col = jnp.ones((n, 1), jnp.float32)   # MXU lane-broadcast helper
    inv_n = jnp.float32(1.0 / n)

    q_all = q_ref[...]          # (N, HB*d_k) f32, scale already folded in
    k_all = k_ref[...]          # (N, HB*d_k) f32
    v_all = v_ref[...]          # (N, HB*d_k) bf16

    outs = []
    # TODO(synk): for long N (v7x 64 MiB VMEM) stream K/V tiles with a running
    # max/sum for M and bound per-head live ranges via fori_loop + VMEM scratch
    # instead of this statically unrolled loop over heads.
    for h in range(heads_per_blk):
        lo, hi = h * d_k, (h + 1) * d_k
        q = q_all[:, lo:hi]
        k = k_all[:, lo:hi]

        # fp32 (HIGHEST) scores: the top-k row selection is tie-sensitive.
        s = jax.lax.dot_general(q, k, (((1,), (1,)), ((), ())),
                                precision=_HIGHEST,
                                preferred_element_type=jnp.float32)   # (N, N)

        # Sparsity measure M = max_j(s) - mean_j(s); row_max reused below for
        # softmax stabilization (saves one full NxN XLU reduction per head).
        row_max = jnp.max(s, axis=-1, keepdims=True)                  # (N, 1)
        m_col = row_max - jnp.sum(s, axis=-1, keepdims=True) * inv_n  # (N, 1)

        # Broadcast M along lanes via a 1s outer product on the MXU (slack
        # unit) instead of a sublane->lane relayout: m_lane[i, j] = M_j.
        # HIGHEST keeps the values exact (bf16x3 decomposition of f32).
        m_lane = jax.lax.dot_general(ones_col, m_col,
                                     (((1,), (1,)), ((), ())),
                                     precision=_HIGHEST,
                                     preferred_element_type=jnp.float32)

        # rank_i = #rows beating row i; ties broken by lower index.
        beats = (m_lane > m_col) | ((m_lane == m_col) & tie_lower)
        rank = jnp.sum(beats.astype(jnp.int32), axis=-1, keepdims=True)
        active = rank < n_top                                          # (N, 1)

        # Non-selected rows filled with -1e9 -> uniform softmax (as reference).
        att = jnp.where(active, s, jnp.float32(-1.0e9))
        # Reuse row_max; inactive rows must be stabilized with -1e9 (their own
        # row max) or exp() underflows to an all-zero row.
        att_max = jnp.where(active, row_max, jnp.float32(-1.0e9))
        p = jnp.exp(att - att_max)
        p = p * pl.reciprocal(jnp.sum(p, axis=-1, keepdims=True), approx=True)
        # TODO(synk): attention dropout omitted (eval-mode identity).

        outs.append(jnp.dot(p.astype(jnp.bfloat16), v_all[:, lo:hi],
                            preferred_element_type=jnp.float32))

    out = outs[0] if heads_per_blk == 1 else jnp.concatenate(outs, axis=-1)
    o_ref[...] = out.astype(o_ref.dtype)    # single lane-dense (N, blk_c) store


def _heads_per_block(n_heads, d_k):
    # Smallest head group whose lane width is a multiple of 128 (lane-dense
    # DMA); otherwise take all heads so the block spans the full channel dim
    # (full-dim blocks are always legal).
    for cand in range(1, n_heads + 1):
        if n_heads % cand == 0 and (cand * d_k) % 128 == 0:
            return cand
    return n_heads


def prob_sparse_attention(q2d, k2d, v2d, *, b, n, c, n_heads, n_top):
    d_k = c // n_heads
    hb = _heads_per_block(n_heads, d_k)
    hg = n_heads // hb
    blk_c = hb * d_k

    q3 = q2d.reshape(b, n, c)   # free reshapes (no data movement)
    k3 = k2d.reshape(b, n, c)
    v3 = v2d.reshape(b, n, c)

    # Batch dim squeezed out of the kernel refs (block dim = None).
    spec = pl.BlockSpec((None, n, blk_c), lambda bi, gi: (bi, 0, gi))
    kernel = functools.partial(_prob_sparse_attn_kernel,
                               n_top=n_top, heads_per_blk=hb, d_k=d_k)
    return pl.pallas_call(
        kernel,
        grid=(b, hg),
        in_specs=[spec, spec, spec],
        out_specs=spec,
        out_shape=jax.ShapeDtypeStruct((b, n, c), jnp.bfloat16),
        compiler_params=pltpu.CompilerParams(
            dimension_semantics=("parallel", "parallel"),
            vmem_limit_bytes=_vmem_limit_bytes()),
    )(q3, k3, v3)


# ----------------------------------------------------------------------------
# Full module forward.
# ----------------------------------------------------------------------------
def prob_sparse_self_attention(x, params, n_heads):
    w_qkv, b_qkv, w_out, b_out = params
    b, n, c = x.shape
    d_k = c // n_heads
    scale = 1.0 / math.sqrt(d_k)
    n_top = max(1, min(int(n * 0.25), n - 1))

    q2d, k2d, v2d = qkv_projection(x.reshape(b * n, c), w_qkv, b_qkv,
                                   scale=scale)
    attn = prob_sparse_attention(q2d, k2d, v2d, b=b, n=n, c=c,
                                 n_heads=n_heads, n_top=n_top)
    out = out_projection(attn.reshape(b * n, c), w_out, b_out)
    return out.reshape(b, n, c)


# ----------------------------------------------------------------------------
# Pure-JAX reference (mirrors the PyTorch forward, eval mode, true fp32 on the
# selection-critical matmuls).
# ----------------------------------------------------------------------------
def reference(x, params, n_heads):
    w_qkv, b_qkv, w_out, b_out = params
    b, n, c = x.shape
    dk = c // n_heads
    scale = 1.0 / math.sqrt(dk)
    n_top = max(1, min(int(n * 0.25), n - 1))

    qkv = jnp.dot(x.reshape(b * n, c), w_qkv, precision=_HIGHEST) + b_qkv
    qkv = qkv.reshape(b, n, 3, n_heads, dk).transpose(2, 0, 3, 1, 4)
    q, k, v = qkv[0], qkv[1], qkv[2]

    s = jnp.einsum("bhnd,bhmd->bhnm", q, k, precision=_HIGHEST) * scale
    m_score = jnp.max(s, axis=-1) - jnp.mean(s, axis=-1)               # (B,H,N)
    _, top_idx = jax.lax.top_k(m_score, n_top)                         # (B,H,k)
    active = (top_idx[..., :, None]
              == jnp.arange(n)[None, None, None, :]).any(axis=2)       # (B,H,N)
    attn = jnp.where(active[..., None], s, -1.0e9)
    attn = jax.nn.softmax(attn, axis=-1)
    out = jnp.einsum("bhnm,bhmd->bhnd", attn, v)
    out = out.transpose(0, 2, 1, 3).reshape(b, n, c)
    return jnp.dot(out, w_out, precision=_HIGHEST) + b_out


if __name__ == "__main__":
    B, N, C, H = 2, 8, 32, 4     # batch, seq, d_model, n_heads

    key = jax.random.PRNGKey(0)
    k1, k2, k3, k4, kx = jax.random.split(key, 5)
    bound = 1.0 / math.sqrt(C)
    # Parameters stored as (in, out) so kernels compute x @ W + b.
    w_qkv = jax.random.uniform(k1, (C, 3 * C), jnp.float32, -bound, bound)
    b_qkv = jax.random.uniform(k2, (1, 3 * C), jnp.float32, -bound, bound)
    w_out = jax.random.uniform(k3, (C, C), jnp.float32, -bound, bound)
    b_out = jax.random.uniform(k4, (1, C), jnp.float32, -bound, bound)
    params = (w_qkv, b_qkv, w_out, b_out)

    x = jax.random.normal(kx, (B, N, C), jnp.float32)

    out = prob_sparse_self_attention(x, params, H)
    out = jax.block_until_ready(out)

    ref = reference(x, params, H)
    assert out.shape == (B, N, C)
    # Tolerance covers the bf16 storage of V / attention output, bf16 MXU
    # inputs on P@V / out_proj, and the approximate (EUP) softmax reciprocal;
    # the top-k selection path is fp32 (HIGHEST) so no selection flips vs the
    # fp32 reference.
    assert jnp.allclose(out, ref, atol=3e-2, rtol=3e-2), (
        "mismatch vs reference, max abs err = "
        f"{float(jnp.max(jnp.abs(out - ref)))}")

    print("KERNEL_OK")
</pallas_src>

<mosaic_0001>
module attributes {stable_mosaic.version = 11 : i64} {
  func.func @_qkv_proj_kernel(%arg0: i32, %arg1: memref<16x32xf32, #tpu.memory_space<vmem>>, %arg2: memref<32x96xf32, #tpu.memory_space<vmem>>, %arg3: memref<1x96xf32, #tpu.memory_space<vmem>>, %arg4: memref<16x32xf32, #tpu.memory_space<vmem>>, %arg5: memref<16x32xf32, #tpu.memory_space<vmem>>, %arg6: memref<16x32xbf16, #tpu.memory_space<vmem>>) attributes {dimension_semantics = [#tpu.dimension_semantics<parallel>], iteration_bounds = array<i64: 1>, scalar_prefetch = 0 : i64, scratch_operands = 0 : i64, tpu.core_type = #tpu.core_type<tc>, window_params = [{transform_indices = @transform_0, window_bounds = array<i64: 16, 32>}, {pipeline_mode = #tpu.pipeline_mode<synchronous>, transform_indices = @transform_1, window_bounds = array<i64: 32, 96>}, {pipeline_mode = #tpu.pipeline_mode<synchronous>, transform_indices = @transform_2, window_bounds = array<i64: 1, 96>}, {transform_indices = @transform_3, window_bounds = array<i64: 16, 32>}, {transform_indices = @transform_4, window_bounds = array<i64: 16, 32>}, {transform_indices = @transform_5, window_bounds = array<i64: 16, 32>}]} {
    %c0 = arith.constant 0 : index
    %c0_0 = arith.constant 0 : index
    %0 = vector.load %arg1[%c0, %c0_0] : memref<16x32xf32, #tpu.memory_space<vmem>>, vector<16x32xf32>
    %c0_1 = arith.constant 0 : index
    %c0_2 = arith.constant 0 : index
    %1 = vector.load %arg2[%c0_1, %c0_2] : memref<32x96xf32, #tpu.memory_space<vmem>>, vector<32x96xf32>
    %cst = arith.constant dense<0.000000e+00> : vector<16x96xf32>
    %2 = tpu.matmul %0, %1, %cst {dimension_numbers = #tpu.dot_dimension_numbers<[1], [0], [0], [1], [0, 0, 1, 1], [], []>, precision = #tpu.contract_precision<fp32>} : vector<16x32xf32>, vector<32x96xf32>, vector<16x96xf32> -> vector<16x96xf32>
    %c0_3 = arith.constant 0 : index
    %c0_4 = arith.constant 0 : index
    %3 = vector.load %arg3[%c0_3, %c0_4] : memref<1x96xf32, #tpu.memory_space<vmem>>, vector<1x96xf32>
    %4 = vector.broadcast %3 : vector<1x96xf32> to vector<16x96xf32>
    %5 = arith.addf %2, %4 : vector<16x96xf32>
    %6 = vector.extract_strided_slice %5 {offsets = [0, 0], sizes = [16, 32], strides = [1, 1]} : vector<16x96xf32> to vector<16x32xf32>
    %cst_5 = arith.constant 0.353553385 : f32
    %7 = vector.broadcast %cst_5 : f32 to vector<16x32xf32>
    %8 = arith.mulf %6, %7 : vector<16x32xf32>
    %c0_6 = arith.constant 0 : index
    %c0_7 = arith.constant 0 : index
    %9 = vector.load %arg4[%c0_6, %c0_7] : memref<16x32xf32, #tpu.memory_space<vmem>>, vector<16x32xf32>
    tpu.vector_store %arg4[%c0_6, %c0_7], %8 {strides = array<i32>} : memref<16x32xf32, #tpu.memory_space<vmem>>, vector<16x32xf32>,
    %10 = vector.extract_strided_slice %5 {offsets = [0, 32], sizes = [16, 32], strides = [1, 1]} : vector<16x96xf32> to vector<16x32xf32>
    %c0_8 = arith.constant 0 : index
    %c0_9 = arith.constant 0 : index
    %11 = vector.load %arg5[%c0_8, %c0_9] : memref<16x32xf32, #tpu.memory_space<vmem>>, vector<16x32xf32>
    tpu.vector_store %arg5[%c0_8, %c0_9], %10 {strides = array<i32>} : memref<16x32xf32, #tpu.memory_space<vmem>>, vector<16x32xf32>,
    %12 = vector.extract_strided_slice %5 {offsets = [0, 64], sizes = [16, 32], strides = [1, 1]} : vector<16x96xf32> to vector<16x32xf32>
    %13 = arith.truncf %12 : vector<16x32xf32> to vector<16x32xbf16>
    %c0_10 = arith.constant 0 : index
    %c0_11 = arith.constant 0 : index
    %14 = vector.load %arg6[%c0_10, %c0_11] : memref<16x32xbf16, #tpu.memory_space<vmem>>, vector<16x32xbf16>
    tpu.vector_store %arg6[%c0_10, %c0_11], %13 {strides = array<i32>} : memref<16x32xbf16, #tpu.memory_space<vmem>>, vector<16x32xbf16>,
    return
  }
  func.func @transform_0(%arg0: i32) -> (i32, i32) {
    %c0_i32 = arith.constant 0 : i32
    %c0_i32_0 = arith.constant 0 : i32
    return %arg0, %c0_i32 : i32, i32
  }
  func.func @transform_1(%arg0: i32) -> (i32, i32) {
    %c0_i32 = arith.constant 0 : i32
    %c0_i32_0 = arith.constant 0 : i32
    %c0_i32_1 = arith.constant 0 : i32
    return %c0_i32, %c0_i32_0 : i32, i32
  }
  func.func @transform_2(%arg0: i32) -> (i32, i32) {
    %c0_i32 = arith.constant 0 : i32
    %c0_i32_0 = arith.constant 0 : i32
    %c0_i32_1 = arith.constant 0 : i32
    return %c0_i32, %c0_i32_0 : i32, i32
  }
  func.func @transform_3(%arg0: i32) -> (i32, i32) {
    %c0_i32 = arith.constant 0 : i32
    %c0_i32_0 = arith.constant 0 : i32
    return %arg0, %c0_i32 : i32, i32
  }
  func.func @transform_4(%arg0: i32) -> (i32, i32) {
    %c0_i32 = arith.constant 0 : i32
    %c0_i32_0 = arith.constant 0 : i32
    return %arg0, %c0_i32 : i32, i32
  }
  func.func @transform_5(%arg0: i32) -> (i32, i32) {
    %c0_i32 = arith.constant 0 : i32
    %c0_i32_0 = arith.constant 0 : i32
    return %arg0, %c0_i32 : i32, i32
  }
}

</mosaic_0001>

<llo_original>
// kernel: tpu_custom_call.1
$region0: #{tpu_custom_call.1}
  #allocation0 [shape = 'u32[]', space=smem, size = 0x4, offset = 0x4, fixed_abs, tag = 'smem constant byte address 0x4 - core index']
  #allocation1 [shape = 'u32[144,128]{1,0:T(1,128)}', space=vmem, size = 0x12000, scoped, tag = 'internal scratch']
  %s0 = inlined_call_operand.hbm [shape: f32[16,32], index: 0, kind: input, shape index: {}]
  %s1 = inlined_call_operand.hbm [shape: f32[32,96], index: 1, kind: input, shape index: {}]
  %s2 = inlined_call_operand.vmem [shape: f32[1,96], index: 2, kind: input, shape index: {}]
  %s3 = inlined_call_operand.hbm [shape: f32[16,32], index: 3, kind: output, shape index: {0}]
  %s4 = inlined_call_operand.hbm [shape: f32[16,32], index: 4, kind: output, shape index: {1}]
  %s5 = inlined_call_operand.hbm [shape: bf16[16,32], index: 5, kind: output, shape index: {2}]
  %6 = xla_tuple %s3, %s4, %s5
  %s7 = sld [smem:[#allocation0]]
  $region46: #{tpu_custom_call.1} parent=0
    _
  %s9 = ssub.s32 1, %s7
  %s10 = scalar_select 0, %s9, %s7
  $region1: #{tpu_custom_call.1} parent=0
    #allocation2 [shape = 'u8[8192]{0}', space=vmem, size = 0x2000, scoped, tag = 'input window, operand 0, single buffered']
    #allocation3 [shape = 's32[1]{0}', space=sflag, size = 0x4, scoped, tag = 'scoped memory for tpu_custom_call.1']
    #allocation4 [shape = 's32[1]{0}', space=sflag, size = 0x4, scoped, tag = 'scoped memory for tpu_custom_call.1']
    #allocation5 [shape = 'u8[16384]{0}', space=vmem, size = 0x4000, scoped, tag = 'input window, operand 1, single buffered']
    #allocation6 [shape = 's32[1]{0}', space=sflag, size = 0x4, scoped, tag = 'scoped memory for tpu_custom_call.1']
    #allocation7 [shape = 'u8[8192]{0}', space=vmem, size = 0x2000, scoped, tag = 'output window, operand 0, single buffered']
    #allocation8 [shape = 'u8[8192]{0}', space=vmem, size = 0x2000, scoped, tag = 'output window, operand 1, single buffered']
    #allocation9 [shape = 's32[1]{0}', space=sflag, size = 0x4, scoped, tag = 'scoped memory for tpu_custom_call.1']
    #allocation10 [shape = 'u8[4096]{0}', space=vmem, size = 0x1000, scoped, tag = 'output window, operand 2, single buffered']
    %11 = vsyncpa [#allocation3], 0
    %12 = vsyncpa [#allocation6], 0
    %13 = vsyncpa [#allocation4], 0
    %14 = vsyncpa [#allocation9], 0
    // Predicated region
    $region2: #{tpu_custom_call.1} parent=1 // pred_check
      _
    $region3: #{tpu_custom_call.1} parent=1 // pred_check_branch
      %16 = sbr.rel (0) target = $region5
    $region4: #{tpu_custom_call.1} parent=1 // pred_region
      %s18 = ssub.s32 256, 256
      %19 = vsyncadd [#allocation3], %s18
      %s20 = sshll.u32 [#allocation2], 4
      %s21 = int_to_ptr.vmem [resolvable:$true] %s20
      %26 = dma.hbm_to_vmem [thread:$0]  %s0, 256, %s21, [#allocation3], 128, 128, 8
    $region5: #{tpu_custom_call.1} parent=1 // pred_fallthru
      _
    // Predicated region
    $region6: #{tpu_custom_call.1} parent=1 // pred_check
      _
    $region7: #{tpu_custom_call.1} parent=1 // pred_check_branch
      %28 = sbr.rel (0) target = $region9
    $region8: #{tpu_custom_call.1} parent=1 // pred_region
      %s30 = ssub.s32 512, 512
      %31 = vsyncadd [#allocation6], %s30
      %s32 = sshll.u32 [#allocation5], 4
      %s33 = int_to_ptr.vmem [resolvable:$true] %s32
      %38 = dma.hbm_to_vmem [thread:$0]  %s1, 512, %s33, [#allocation6], 128, 128, 8
    $region9: #{tpu_custom_call.1} parent=1 // pred_fallthru
      _
    // Predicated region
    $region10: #{tpu_custom_call.1} parent=1 // pred_check
      _
    $region11: #{tpu_custom_call.1} parent=1 // pred_check_branch
      %40 = sbr.rel (0) target = $region13
    $region12: #{tpu_custom_call.1} parent=1 // pred_region
      _
    $region13: #{tpu_custom_call.1} parent=1 // pred_fallthru
      _
    // Predicated region
    $region14: #{tpu_custom_call.1} parent=1 // pred_check
      _
    $region15: #{tpu_custom_call.1} parent=1 // pred_check_branch
      %42 = sbr.rel (0) target = $region17
    $region16: #{tpu_custom_call.1} parent=1 // pred_region
      %43 = dma.done [#allocation3], 256
    $region17: #{tpu_custom_call.1} parent=1 // pred_fallthru
      _
    // Predicated region
    $region18: #{tpu_custom_call.1} parent=1 // pred_check
      _
    $region19: #{tpu_custom_call.1} parent=1 // pred_check_branch
      %45 = sbr.rel (0) target = $region21
    $region20: #{tpu_custom_call.1} parent=1 // pred_region
      %46 = dma.done [#allocation6], 512
    $region21: #{tpu_custom_call.1} parent=1 // pred_fallthru
      _
    %v47 = vld [vmem:[#allocation2] sm:$0xff]
    %v48 = vld [vmem:[#allocation2 + $0x8] sm:$0xff]
    %v49 = vld [vmem:[#allocation5] sm:$0xff]
    %v50 = vld [vmem:[#allocation5 + $0x8] sm:$0xff]
    %v51 = vld [vmem:[#allocation5 + $0x10] sm:$0xff]
    %v52 = vld [vmem:[#allocation5 + $0x18] sm:$0xff]
    %v53 = vld [vmem:[%s2] sm:$0x1]
    %v55 = vlaneseq
    %v56 = vshrl.u32 %v55, 7
    %v57 = vsub.s32 0, %v56
    %v58 = vrot.slane %v53, %v57
    %vm60 = vcmask 261120
    %v62 = vsel %vm60, %v47, 0
    %v65 = vsel %vm60, %v48, 0
    %67 = vmatprep.subr.mxu0 0.0
    %68 = vmatpush1.msra.mxu0 0.0
    %69 = vmatprep.subr.mxu0 0.0
    %70 = vmatpush1.msra.mxu0 0.0
    %71 = vmatprep.subr.mxu0 0.0
    %72 = vmatpush1.msra.mxu0 0.0
    %73 = vmatprep.subr.mxu0 0.0
    %74 = vmatpush1.msra.mxu0 0.0
    %75 = vmatprep.subr.mxu0 0.0
    %76 = vmatpush1.msra.mxu0 0.0
    %77 = vmatprep.subr.mxu0 0.0
    %78 = vmatpush1.msra.mxu0 0.0
    %79 = vmatprep.subr.mxu0 0.0
    %80 = vmatpush1.msra.mxu0 0.0
    %81 = vmatprep.subr.mxu0 0.0
    %82 = vmatpush1.msra.mxu0 0.0
    %83 = vmatprep.subr.mxu0 0.0
    %84 = vmatpush1.msra.mxu0 0.0
    %85 = vmatprep.subr.mxu0 0.0
    %86 = vmatpush1.msra.mxu0 0.0
    %87 = vmatprep.subr.mxu0 0.0
    %88 = vmatpush1.msra.mxu0 0.0
    %89 = vmatprep.subr.mxu0 0.0
    %90 = vmatpush1.msra.mxu0 0.0
    %91 = vmatprep.subr.mxu0 0.0
    %v92 = vand.u32 %v52, 4294901760
    %93 = vmatpush1.msra.mxu0 %v92
    %94 = vmatprep.subr.mxu0 0.0
    %v95 = vand.u32 %v51, 4294901760
    %96 = vmatpush1.msra.mxu0 %v95
    %97 = vmatprep.subr.mxu0 0.0
    %v98 = vand.u32 %v50, 4294901760
    %99 = vmatpush1.msra.mxu0 %v98
    %100 = vmatprep.subr.mxu0 0.0
    %v101 = vand.u32 %v49, 4294901760
    %102 = vmatpush1.msra.mxu0 %v101
    %103 = vmatprep.subr.mxu0 0.0
    %104 = vmatpush2.msra.mxu0 0.0
    %105 = vmatprep.subr.mxu0 0.0
    %106 = vmatpush2.msra.mxu0 0.0
    %107 = vmatprep.subr.mxu0 0.0
    %108 = vmatpush2.msra.mxu0 0.0
    %109 = vmatprep.subr.mxu0 0.0
    %110 = vmatpush2.msra.mxu0 0.0
    %111 = vmatprep.subr.mxu0 0.0
    %112 = vmatpush2.msra.mxu0 0.0
    %113 = vmatprep.subr.mxu0 0.0
    %114 = vmatpush2.msra.mxu0 0.0
    %115 = vmatprep.subr.mxu0 0.0
    %116 = vmatpush2.msra.mxu0 0.0
    %117 = vmatprep.subr.mxu0 0.0
    %118 = vmatpush2.msra.mxu0 0.0
    %119 = vmatprep.subr.mxu0 0.0
    %120 = vmatpush2.msra.mxu0 0.0
    %121 = vmatprep.subr.mxu0 0.0
    %122 = vmatpush2.msra.mxu0 0.0
    %123 = vmatprep.subr.mxu0 0.0
    %124 = vmatpush2.msra.mxu0 0.0
    %125 = vmatprep.subr.mxu0 0.0
    %126 = vmatpush2.msra.mxu0 0.0
    %127 = vmatprep.subr.mxu0 0.0
    %128 = vmatpush2.msra.mxu0 0.0
    %129 = vmatprep.subr.mxu0 0.0
    %130 = vmatpush2.msra.mxu0 0.0
    %131 = vmatprep.subr.mxu0 0.0
    %132 = vmatpush2.msra.mxu0 0.0
    %133 = vmatprep.subr.mxu0 0.0
    %134 = vmatpush2.msra.mxu0 0.0
    %135 = vmatprep.mubr.f32.mxu0 0.0
    %v136 = vand.u32 %v62, 4294901760
    %v137 = vsub.f32 %v62, %v136
    %v138 = vand.u32 %v137, 4294901760
    %v139 = vsub.f32 %v137, %v138
    %v140 = vand.u32 %v139, 4294901760
    %141 = vmatmul.mubr.f32.gmra.mxu0 %v140
    %v142 = vpop.f32.mrf.mxu0
    %v143 = vadd.f32 %v58, %v142
    %v144 = vpop.f32.mrf.mxu0
    %145 = vmatprep.mubr.f32.mxu0 0.0
    %v146 = vand.u32 %v65, 4294901760
    %v147 = vsub.f32 %v65, %v146
    %v148 = vand.u32 %v147, 4294901760
    %v149 = vsub.f32 %v147, %v148
    %v150 = vand.u32 %v149, 4294901760
    %151 = vmatmul.mubr.f32.gmra.mxu0 %v150
    %v152 = vpop.f32.mrf.mxu0
    %v153 = vadd.f32 %v58, %v152
    %v154 = vpop.f32.mrf.mxu0
    %155 = vdwg.mxu0
    %156 = vmatprep.subr.mxu0 0.0
    %157 = vmatpush1.msra.mxu0 0.0
    %158 = vmatprep.subr.mxu0 0.0
    %159 = vmatpush1.msra.mxu0 0.0
    %160 = vmatprep.subr.mxu0 0.0
    %161 = vmatpush1.msra.mxu0 0.0
    %162 = vmatprep.subr.mxu0 0.0
    %163 = vmatpush1.msra.mxu0 0.0
    %164 = vmatprep.subr.mxu0 0.0
    %165 = vmatpush1.msra.mxu0 0.0
    %166 = vmatprep.subr.mxu0 0.0
    %167 = vmatpush1.msra.mxu0 0.0
    %168 = vmatprep.subr.mxu0 0.0
    %169 = vmatpush1.msra.mxu0 0.0
    %170 = vmatprep.subr.mxu0 0.0
    %171 = vmatpush1.msra.mxu0 0.0
    %172 = vmatprep.subr.mxu0 0.0
    %173 = vmatpush1.msra.mxu0 0.0
    %174 = vmatprep.subr.mxu0 0.0
    %175 = vmatpush1.msra.mxu0 0.0
    %176 = vmatprep.subr.mxu0 0.0
    %177 = vmatpush1.msra.mxu0 0.0
    %178 = vmatprep.subr.mxu0 0.0
    %179 = vmatpush1.msra.mxu0 0.0
    %180 = vmatprep.subr.mxu0 0.0
    %v181 = vand.u32 %v52, 4294901760
    %v182 = vsub.f32 %v52, %v181
    %v183 = vand.u32 %v182, 4294901760
    %v184 = vsub.f32 %v182, %v183
    %v185 = vand.u32 %v184, 4294901760
    %186 = vmatpush1.msra.mxu0 %v185
    %187 = vmatprep.subr.mxu0 0.0
    %v188 = vand.u32 %v51, 4294901760
    %v189 = vsub.f32 %v51, %v188
    %v190 = vand.u32 %v189, 4294901760
    %v191 = vsub.f32 %v189, %v190
    %v192 = vand.u32 %v191, 4294901760
    %193 = vmatpush1.msra.mxu0 %v192
    %194 = vmatprep.subr.mxu0 0.0
    %v195 = vand.u32 %v50, 4294901760
    %v196 = vsub.f32 %v50, %v195
    %v197 = vand.u32 %v196, 4294901760
    %v198 = vsub.f32 %v196, %v197
    %v199 = vand.u32 %v198, 4294901760
    %200 = vmatpush1.msra.mxu0 %v199
    %201 = vmatprep.subr.mxu0 0.0
    %v202 = vand.u32 %v49, 4294901760
    %v203 = vsub.f32 %v49, %v202
    %v204 = vand.u32 %v203, 4294901760
    %v205 = vsub.f32 %v203, %v204
    %v206 = vand.u32 %v205, 4294901760
    %207 = vmatpush1.msra.mxu0 %v206
    %208 = vmatprep.subr.mxu0 0.0
    %209 = vmatpush2.msra.mxu0 0.0
    %210 = vmatprep.subr.mxu0 0.0
    %211 = vmatpush2.msra.mxu0 0.0
    %212 = vmatprep.subr.mxu0 0.0
    %213 = vmatpush2.msra.mxu0 0.0
    %214 = vmatprep.subr.mxu0 0.0
    %215 = vmatpush2.msra.mxu0 0.0
    %216 = vmatprep.subr.mxu0 0.0
    %217 = vmatpush2.msra.mxu0 0.0
    %218 = vmatprep.subr.mxu0 0.0
    %219 = vmatpush2.msra.mxu0 0.0
    %220 = vmatprep.subr.mxu0 0.0
    %221 = vmatpush2.msra.mxu0 0.0
    %222 = vmatprep.subr.mxu0 0.0
    %223 = vmatpush2.msra.mxu0 0.0
    %224 = vmatprep.subr.mxu0 0.0
    %225 = vmatpush2.msra.mxu0 0.0
    %226 = vmatprep.subr.mxu0 0.0
    %227 = vmatpush2.msra.mxu0 0.0
    %228 = vmatprep.subr.mxu0 0.0
    %229 = vmatpush2.msra.mxu0 0.0
    %230 = vmatprep.subr.mxu0 0.0
    %231 = vmatpush2.msra.mxu0 0.0
    %232 = vmatprep.subr.mxu0 0.0
    %233 = vmatpush2.msra.mxu0 0.0
    %234 = vmatprep.subr.mxu0 0.0
    %235 = vmatpush2.msra.mxu0 0.0
    %236 = vmatprep.subr.mxu0 0.0
    %237 = vmatpush2.msra.mxu0 0.0
    %238 = vmatprep.subr.mxu0 0.0
    %239 = vmatpush2.msra.mxu0 0.0
    %240 = vmatprep.mubr.f32.mxu0 0.0
    %v241 = vand.u32 %v62, 4294901760
    %242 = vmatmul.mubr.f32.gmra.mxu0 %v241
    %v243 = vpop.f32.mrf.mxu0
    %v244 = vadd.f32 %v143, %v243
    %v245 = vpop.f32.mrf.mxu0
    %246 = vmatprep.mubr.f32.mxu0 0.0
    %v247 = vand.u32 %v65, 4294901760
    %248 = vmatmul.mubr.f32.gmra.mxu0 %v247
    %v249 = vpop.f32.mrf.mxu0
    %v250 = vadd.f32 %v153, %v249
    %v251 = vpop.f32.mrf.mxu0
    %252 = vdwg.mxu0
    %253 = vmatprep.subr.mxu0 0.0
    %254 = vmatpush1.msra.mxu0 0.0
    %255 = vmatprep.subr.mxu0 0.0
    %256 = vmatpush1.msra.mxu0 0.0
    %257 = vmatprep.subr.mxu0 0.0
    %258 = vmatpush1.msra.mxu0 0.0
    %259 = vmatprep.subr.mxu0 0.0
    %260 = vmatpush1.msra.mxu0 0.0
    %261 = vmatprep.subr.mxu0 0.0
    %262 = vmatpush1.msra.mxu0 0.0
    %263 = vmatprep.subr.mxu0 0.0
    %264 = vmatpush1.msra.mxu0 0.0
    %265 = vmatprep.subr.mxu0 0.0
    %266 = vmatpush1.msra.mxu0 0.0
    %267 = vmatprep.subr.mxu0 0.0
    %268 = vmatpush1.msra.mxu0 0.0
    %269 = vmatprep.subr.mxu0 0.0
    %270 = vmatpush1.msra.mxu0 0.0
    %271 = vmatprep.subr.mxu0 0.0
    %272 = vmatpush1.msra.mxu0 0.0
    %273 = vmatprep.subr.mxu0 0.0
    %274 = vmatpush1.msra.mxu0 0.0
    %275 = vmatprep.subr.mxu0 0.0
    %276 = vmatpush1.msra.mxu0 0.0
    %277 = vmatprep.subr.mxu0 0.0
    %v278 = vand.u32 %v52, 4294901760
    %v279 = vsub.f32 %v52, %v278
    %280 = vmatpush1.msra.mxu0 %v279
    %281 = vmatprep.subr.mxu0 0.0
    %v282 = vand.u32 %v51, 4294901760
    %v283 = vsub.f32 %v51, %v282
    %284 = vmatpush1.msra.mxu0 %v283
    %285 = vmatprep.subr.mxu0 0.0
    %v286 = vand.u32 %v50, 4294901760
    %v287 = vsub.f32 %v50, %v286
    %288 = vmatpush1.msra.mxu0 %v287
    %289 = vmatprep.subr.mxu0 0.0
    %v290 = vand.u32 %v49, 4294901760
    %v291 = vsub.f32 %v49, %v290
    %292 = vmatpush1.msra.mxu0 %v291
    %293 = vmatprep.subr.mxu0 0.0
    %294 = vmatpush2.msra.mxu0 0.0
    %295 = vmatprep.subr.mxu0 0.0
    %296 = vmatpush2.msra.mxu0 0.0
    %297 = vmatprep.subr.mxu0 0.0
    %298 = vmatpush2.msra.mxu0 0.0
    %299 = vmatprep.subr.mxu0 0.0
    %300 = vmatpush2.msra.mxu0 0.0
    %301 = vmatprep.subr.mxu0 0.0
    %302 = vmatpush2.msra.mxu0 0.0
    %303 = vmatprep.subr.mxu0 0.0
    %304 = vmatpush2.msra.mxu0 0.0
    %305 = vmatprep.subr.mxu0 0.0
    %306 = vmatpush2.msra.mxu0 0.0
    %307 = vmatprep.subr.mxu0 0.0
    %308 = vmatpush2.msra.mxu0 0.0
    %309 = vmatprep.subr.mxu0 0.0
    %310 = vmatpush2.msra.mxu0 0.0
    %311 = vmatprep.subr.mxu0 0.0
    %312 = vmatpush2.msra.mxu0 0.0
    %313 = vmatprep.subr.mxu0 0.0
    %314 = vmatpush2.msra.mxu0 0.0
    %315 = vmatprep.subr.mxu0 0.0
    %316 = vmatpush2.msra.mxu0 0.0
    %317 = vmatprep.subr.mxu0 0.0
    %318 = vmatpush2.msra.mxu0 0.0
    %319 = vmatprep.subr.mxu0 0.0
    %320 = vmatpush2.msra.mxu0 0.0
    %321 = vmatprep.subr.mxu0 0.0
    %322 = vmatpush2.msra.mxu0 0.0
    %323 = vmatprep.subr.mxu0 0.0
    %324 = vmatpush2.msra.mxu0 0.0
    %325 = vmatprep.mubr.f32.mxu0 0.0
    %v326 = vand.u32 %v62, 4294901760
    %v327 = vsub.f32 %v62, %v326
    %328 = vmatmul.mubr.f32.gmra.mxu0 %v327
    %v329 = vpop.f32.mrf.mxu0
    %v330 = vadd.f32 %v244, %v329
    %v331 = vpop.f32.mrf.mxu0
    %332 = vmatprep.mubr.f32.mxu0 0.0
    %v333 = vand.u32 %v65, 4294901760
    %v334 = vsub.f32 %v65, %v333
    %335 = vmatmul.mubr.f32.gmra.mxu0 %v334
    %v336 = vpop.f32.mrf.mxu0
    %v337 = vadd.f32 %v250, %v336
    %v338 = vpop.f32.mrf.mxu0
    %339 = vdwg.mxu0
    %340 = vmatprep.subr.mxu0 0.0
    %341 = vmatpush1.msra.mxu0 0.0
    %342 = vmatprep.subr.mxu0 0.0
    %343 = vmatpush1.msra.mxu0 0.0
    %344 = vmatprep.subr.mxu0 0.0
    %345 = vmatpush1.msra.mxu0 0.0
    %346 = vmatprep.subr.mxu0 0.0
    %347 = vmatpush1.msra.mxu0 0.0
    %348 = vmatprep.subr.mxu0 0.0
    %349 = vmatpush1.msra.mxu0 0.0
    %350 = vmatprep.subr.mxu0 0.0
    %351 = vmatpush1.msra.mxu0 0.0
    %352 = vmatprep.subr.mxu0 0.0
    %353 = vmatpush1.msra.mxu0 0.0
    %354 = vmatprep.subr.mxu0 0.0
    %355 = vmatpush1.msra.mxu0 0.0
    %356 = vmatprep.subr.mxu0 0.0
    %357 = vmatpush1.msra.mxu0 0.0
    %358 = vmatprep.subr.mxu0 0.0
    %359 = vmatpush1.msra.mxu0 0.0
    %360 = vmatprep.subr.mxu0 0.0
    %361 = vmatpush1.msra.mxu0 0.0
    %362 = vmatprep.subr.mxu0 0.0
    %363 = vmatpush1.msra.mxu0 0.0
    %364 = vmatprep.subr.mxu0 0.0
    %v365 = vand.u32 %v52, 4294901760
    %366 = vmatpush1.msra.mxu0 %v365
    %367 = vmatprep.subr.mxu0 0.0
    %v368 = vand.u32 %v51, 4294901760
    %369 = vmatpush1.msra.mxu0 %v368
    %370 = vmatprep.subr.mxu0 0.0
    %v371 = vand.u32 %v50, 4294901760
    %372 = vmatpush1.msra.mxu0 %v371
    %373 = vmatprep.subr.mxu0 0.0
    %v374 = vand.u32 %v49, 4294901760
    %375 = vmatpush1.msra.mxu0 %v374
    %376 = vmatprep.subr.mxu0 0.0
    %377 = vmatpush2.msra.mxu0 0.0
    %378 = vmatprep.subr.mxu0 0.0
    %379 = vmatpush2.msra.mxu0 0.0
    %380 = vmatprep.subr.mxu0 0.0
    %381 = vmatpush2.msra.mxu0 0.0
    %382 = vmatprep.subr.mxu0 0.0
    %383 = vmatpush2.msra.mxu0 0.0
    %384 = vmatprep.subr.mxu0 0.0
    %385 = vmatpush2.msra.mxu0 0.0
    %386 = vmatprep.subr.mxu0 0.0
    %387 = vmatpush2.msra.mxu0 0.0
    %388 = vmatprep.subr.mxu0 0.0
    %389 = vmatpush2.msra.mxu0 0.0
    %390 = vmatprep.subr.mxu0 0.0
    %391 = vmatpush2.msra.mxu0 0.0
    %392 = vmatprep.subr.mxu0 0.0
    %393 = vmatpush2.msra.mxu0 0.0
    %394 = vmatprep.subr.mxu0 0.0
    %395 = vmatpush2.msra.mxu0 0.0
    %396 = vmatprep.subr.mxu0 0.0
    %397 = vmatpush2.msra.mxu0 0.0
    %398 = vmatprep.subr.mxu0 0.0
    %399 = vmatpush2.msra.mxu0 0.0
    %400 = vmatprep.subr.mxu0 0.0
    %401 = vmatpush2.msra.mxu0 0.0
    %402 = vmatprep.subr.mxu0 0.0
    %403 = vmatpush2.msra.mxu0 0.0
    %404 = vmatprep.subr.mxu0 0.0
    %405 = vmatpush2.msra.mxu0 0.0
    %406 = vmatprep.subr.mxu0 0.0
    %407 = vmatpush2.msra.mxu0 0.0
    %408 = vmatprep.mubr.f32.mxu0 0.0
    %v409 = vand.u32 %v62, 4294901760
    %v410 = vsub.f32 %v62, %v409
    %v411 = vand.u32 %v410, 4294901760
    %412 = vmatmul.mubr.f32.gmra.mxu0 %v411
    %v413 = vpop.f32.mrf.mxu0
    %v414 = vadd.f32 %v330, %v413
    %v415 = vpop.f32.mrf.mxu0
    %416 = vmatprep.mubr.f32.mxu0 0.0
    %v417 = vand.u32 %v65, 4294901760
    %v418 = vsub.f32 %v65, %v417
    %v419 = vand.u32 %v418, 4294901760
    %420 = vmatmul.mubr.f32.gmra.mxu0 %v419
    %v421 = vpop.f32.mrf.mxu0
    %v422 = vadd.f32 %v337, %v421
    %v423 = vpop.f32.mrf.mxu0
    %424 = vdwg.mxu0
    %425 = vmatprep.subr.mxu0 0.0
    %426 = vmatpush1.msra.mxu0 0.0
    %427 = vmatprep.subr.mxu0 0.0
    %428 = vmatpush1.msra.mxu0 0.0
    %429 = vmatprep.subr.mxu0 0.0
    %430 = vmatpush1.msra.mxu0 0.0
    %431 = vmatprep.subr.mxu0 0.0
    %432 = vmatpush1.msra.mxu0 0.0
    %433 = vmatprep.subr.mxu0 0.0
    %434 = vmatpush1.msra.mxu0 0.0
    %435 = vmatprep.subr.mxu0 0.0
    %436 = vmatpush1.msra.mxu0 0.0
    %437 = vmatprep.subr.mxu0 0.0
    %438 = vmatpush1.msra.mxu0 0.0
    %439 = vmatprep.subr.mxu0 0.0
    %440 = vmatpush1.msra.mxu0 0.0
    %441 = vmatprep.subr.mxu0 0.0
    %442 = vmatpush1.msra.mxu0 0.0
    %443 = vmatprep.subr.mxu0 0.0
    %444 = vmatpush1.msra.mxu0 0.0
    %445 = vmatprep.subr.mxu0 0.0
    %446 = vmatpush1.msra.mxu0 0.0
    %447 = vmatprep.subr.mxu0 0.0
    %448 = vmatpush1.msra.mxu0 0.0
    %449 = vmatprep.subr.mxu0 0.0
    %v450 = vand.u32 %v52, 4294901760
    %v451 = vsub.f32 %v52, %v450
    %v452 = vand.u32 %v451, 4294901760
    %453 = vmatpush1.msra.mxu0 %v452
    %454 = vmatprep.subr.mxu0 0.0
    %v455 = vand.u32 %v51, 4294901760
    %v456 = vsub.f32 %v51, %v455
    %v457 = vand.u32 %v456, 4294901760
    %458 = vmatpush1.msra.mxu0 %v457
    %459 = vmatprep.subr.mxu0 0.0
    %v460 = vand.u32 %v50, 4294901760
    %v461 = vsub.f32 %v50, %v460
    %v462 = vand.u32 %v461, 4294901760
    %463 = vmatpush1.msra.mxu0 %v462
    %464 = vmatprep.subr.mxu0 0.0
    %v465 = vand.u32 %v49, 4294901760
    %v466 = vsub.f32 %v49, %v465
    %v467 = vand.u32 %v466, 4294901760
    %468 = vmatpush1.msra.mxu0 %v467
    %469 = vmatprep.subr.mxu0 0.0
    %470 = vmatpush2.msra.mxu0 0.0
    %471 = vmatprep.subr.mxu0 0.0
    %472 = vmatpush2.msra.mxu0 0.0
    %473 = vmatprep.subr.mxu0 0.0
    %474 = vmatpush2.msra.mxu0 0.0
    %475 = vmatprep.subr.mxu0 0.0
    %476 = vmatpush2.msra.mxu0 0.0
    %477 = vmatprep.subr.mxu0 0.0
    %478 = vmatpush2.msra.mxu0 0.0
    %479 = vmatprep.subr.mxu0 0.0
    %480 = vmatpush2.msra.mxu0 0.0
    %481 = vmatprep.subr.mxu0 0.0
    %482 = vmatpush2.msra.mxu0 0.0
    %483 = vmatprep.subr.mxu0 0.0
    %484 = vmatpush2.msra.mxu0 0.0
    %485 = vmatprep.subr.mxu0 0.0
    %486 = vmatpush2.msra.mxu0 0.0
    %487 = vmatprep.subr.mxu0 0.0
    %488 = vmatpush2.msra.mxu0 0.0
    %489 = vmatprep.subr.mxu0 0.0
    %490 = vmatpush2.msra.mxu0 0.0
    %491 = vmatprep.subr.mxu0 0.0
    %492 = vmatpush2.msra.mxu0 0.0
    %493 = vmatprep.subr.mxu0 0.0
    %494 = vmatpush2.msra.mxu0 0.0
    %495 = vmatprep.subr.mxu0 0.0
    %496 = vmatpush2.msra.mxu0 0.0
    %497 = vmatprep.subr.mxu0 0.0
    %498 = vmatpush2.msra.mxu0 0.0
    %499 = vmatprep.subr.mxu0 0.0
    %500 = vmatpush2.msra.mxu0 0.0
    %501 = vmatprep.mubr.f32.mxu0 0.0
    %v502 = vand.u32 %v62, 4294901760
    %503 = vmatmul.mubr.f32.gmra.mxu0 %v502
    %v504 = vpop.f32.mrf.mxu0
    %v505 = vadd.f32 %v414, %v504
    %v506 = vpop.f32.mrf.mxu0
    %507 = vmatprep.mubr.f32.mxu0 0.0
    %v508 = vand.u32 %v65, 4294901760
    %509 = vmatmul.mubr.f32.gmra.mxu0 %v508
    %v510 = vpop.f32.mrf.mxu0
    %v511 = vadd.f32 %v422, %v510
    %v512 = vpop.f32.mrf.mxu0
    %513 = vdwg.mxu0
    %514 = vmatprep.subr.mxu0 0.0
    %515 = vmatpush1.msra.mxu0 0.0
    %516 = vmatprep.subr.mxu0 0.0
    %517 = vmatpush1.msra.mxu0 0.0
    %518 = vmatprep.subr.mxu0 0.0
    %519 = vmatpush1.msra.mxu0 0.0
    %520 = vmatprep.subr.mxu0 0.0
    %521 = vmatpush1.msra.mxu0 0.0
    %522 = vmatprep.subr.mxu0 0.0
    %523 = vmatpush1.msra.mxu0 0.0
    %524 = vmatprep.subr.mxu0 0.0
    %525 = vmatpush1.msra.mxu0 0.0
    %526 = vmatprep.subr.mxu0 0.0
    %527 = vmatpush1.msra.mxu0 0.0
    %528 = vmatprep.subr.mxu0 0.0
    %529 = vmatpush1.msra.mxu0 0.0
    %530 = vmatprep.subr.mxu0 0.0
    %531 = vmatpush1.msra.mxu0 0.0
    %532 = vmatprep.subr.mxu0 0.0
    %533 = vmatpush1.msra.mxu0 0.0
    %534 = vmatprep.subr.mxu0 0.0
    %535 = vmatpush1.msra.mxu0 0.0
    %536 = vmatprep.subr.mxu0 0.0
    %537 = vmatpush1.msra.mxu0 0.0
    %538 = vmatprep.subr.mxu0 0.0
    %v539 = vand.u32 %v52, 4294901760
    %540 = vmatpush1.msra.mxu0 %v539
    %541 = vmatprep.subr.mxu0 0.0
    %v542 = vand.u32 %v51, 4294901760
    %543 = vmatpush1.msra.mxu0 %v542
    %544 = vmatprep.subr.mxu0 0.0
    %v545 = vand.u32 %v50, 4294901760
    %546 = vmatpush1.msra.mxu0 %v545
    %547 = vmatprep.subr.mxu0 0.0
    %v548 = vand.u32 %v49, 4294901760
    %549 = vmatpush1.msra.mxu0 %v548
    %550 = vmatprep.subr.mxu0 0.0
    %551 = vmatpush2.msra.mxu0 0.0
    %552 = vmatprep.subr.mxu0 0.0
    %553 = vmatpush2.msra.mxu0 0.0
    %554 = vmatprep.subr.mxu0 0.0
    %555 = vmatpush2.msra.mxu0 0.0
    %556 = vmatprep.subr.mxu0 0.0
    %557 = vmatpush2.msra.mxu0 0.0
    %558 = vmatprep.subr.mxu0 0.0
    %559 = vmatpush2.msra.mxu0 0.0
    %560 = vmatprep.subr.mxu0 0.0
    %561 = vmatpush2.msra.mxu0 0.0
    %562 = vmatprep.subr.mxu0 0.0
    %563 = vmatpush2.msra.mxu0 0.0
    %564 = vmatprep.subr.mxu0 0.0
    %565 = vmatpush2.msra.mxu0 0.0
    %566 = vmatprep.subr.mxu0 0.0
    %567 = vmatpush2.msra.mxu0 0.0
    %568 = vmatprep.subr.mxu0 0.0
    %569 = vmatpush2.msra.mxu0 0.0
    %570 = vmatprep.subr.mxu0 0.0
    %571 = vmatpush2.msra.mxu0 0.0
    %572 = vmatprep.subr.mxu0 0.0
    %573 = vmatpush2.msra.mxu0 0.0
    %574 = vmatprep.subr.mxu0 0.0
    %575 = vmatpush2.msra.mxu0 0.0
    %576 = vmatprep.subr.mxu0 0.0
    %577 = vmatpush2.msra.mxu0 0.0
    %578 = vmatprep.subr.mxu0 0.0
    %579 = vmatpush2.msra.mxu0 0.0
    %580 = vmatprep.subr.mxu0 0.0
    %581 = vmatpush2.msra.mxu0 0.0
    %582 = vmatprep.mubr.f32.mxu0 0.0
    %v583 = vand.u32 %v62, 4294901760
    %584 = vmatmul.mubr.f32.gmra.mxu0 %v583
    %v585 = vpop.f32.mrf.mxu0
    %v586 = vadd.f32 %v505, %v585
    %v587 = vpop.f32.mrf.mxu0
    %588 = vmatprep.mubr.f32.mxu0 0.0
    %v589 = vand.u32 %v65, 4294901760
    %590 = vmatmul.mubr.f32.gmra.mxu0 %v589
    %v591 = vpop.f32.mrf.mxu0
    %v592 = vadd.f32 %v511, %v591
    %v593 = vpop.f32.mrf.mxu0
    %594 = vdwg.mxu0
    %v595 = vmul.f32 %v586, 0.35355338
    %v596 = vmul.f32 %v592, 0.35355338
    %597 = vst.msk [vmem:[#allocation7] sm:$0xff] %vm60, %v595
    %598 = vst.msk [vmem:[#allocation7 + $0x8] sm:$0xff] %vm60, %v596
    %601 = vrot.lane.b32.xlu0 %v586, 96
    %v602 = vpop.permute.xlu0 %601
    %603 = vrot.lane.b32.xlu0 %v592, 96
    %v604 = vpop.permute.xlu0 %603
    %607 = vst.msk [vmem:[#allocation8] sm:$0xff] %vm60, %v602
    %608 = vst.msk [vmem:[#allocation8 + $0x8] sm:$0xff] %vm60, %v604
    %v609 = vpack.c.bf16 %v592, %v586
    %v611 = vunpack.c.l.b16 %v609
    %v612 = vunpack.c.h.b16 %v609
    %v613 = vpack.c.b16 %v611, %v611
    %v614 = vpack.c.b16 %v612, %v612
    %615 = vrot.lane.b32.xlu0 %v613, 64
    %v616 = vpop.permute.xlu0 %615
    %617 = vrot.lane.b32.xlu0 %v614, 64
    %v618 = vpop.permute.xlu0 %617
    %vm621 = vcmask 257024
    %622 = vst.msk [vmem:[#allocation10] sm:$0xf] %vm621, %v616
    %623 = vst.msk [vmem:[#allocation10 + $0x4] sm:$0xf] %vm621, %v618
    // Predicated region
    $region22: #{tpu_custom_call.1} parent=1 // pred_check
      _
    $region23: #{tpu_custom_call.1} parent=1 // pred_check_branch
      %625 = sbr.rel (0) target = $region25
    $region24: #{tpu_custom_call.1} parent=1 // pred_region
      %s627 = ssub.s32 256, 256
      %628 = vsyncadd [#allocation4], %s627
      %s629 = sshll.u32 [#allocation7], 4
      %s630 = int_to_ptr.vmem [resolvable:$true] %s629
      %635 = dma.vmem_to_hbm [thread:$0]  %s630, 256, %s3, [#allocation4], 128, 128, 8
    $region25: #{tpu_custom_call.1} parent=1 // pred_fallthru
      _
    // Predicated region
    $region26: #{tpu_custom_call.1} parent=1 // pred_check
      _
    $region27: #{tpu_custom_call.1} parent=1 // pred_check_branch
      %637 = sbr.rel (0) target = $region29
    $region28: #{tpu_custom_call.1} parent=1 // pred_region
      %s639 = ssub.s32 256, 256
      %640 = vsyncadd [#allocation9], %s639
      %s641 = sshll.u32 [#allocation8], 4
      %s642 = int_to_ptr.vmem [resolvable:$true] %s641
      %647 = dma.vmem_to_hbm [thread:$0]  %s642, 256, %s4, [#allocation9], 128, 128, 8
    $region29: #{tpu_custom_call.1} parent=1 // pred_fallthru
      _
    // Predicated region
    $region30: #{tpu_custom_call.1} parent=1 // pred_check
      _
    $region31: #{tpu_custom_call.1} parent=1 // pred_check_branch
      %649 = sbr.rel (0) target = $region33
    $region32: #{tpu_custom_call.1} parent=1 // pred_region
      %s651 = ssub.s32 128, 128
      %652 = vsyncadd [#allocation9], %s651
      %s653 = sshll.u32 [#allocation10], 4
      %s654 = int_to_ptr.vmem [resolvable:$true] %s653
      %659 = dma.vmem_to_hbm [thread:$0]  %s654, 128, %s5, [#allocation9], 64, 64, 4
    $region33: #{tpu_custom_call.1} parent=1 // pred_fallthru
      _
    // Predicated region
    $region34: #{tpu_custom_call.1} parent=1 // pred_check
      _
    $region35: #{tpu_custom_call.1} parent=1 // pred_check_branch
      %661 = sbr.rel (0) target = $region37
    $region36: #{tpu_custom_call.1} parent=1 // pred_region
      %662 = dma.done [#allocation4], 256
    $region37: #{tpu_custom_call.1} parent=1 // pred_fallthru
      _
    // Predicated region
    $region38: #{tpu_custom_call.1} parent=1 // pred_check
      _
    $region39: #{tpu_custom_call.1} parent=1 // pred_check_branch
      %664 = sbr.rel (0) target = $region41
    $region40: #{tpu_custom_call.1} parent=1 // pred_region
      %665 = dma.done [#allocation9], 256
    $region41: #{tpu_custom_call.1} parent=1 // pred_fallthru
      _
    // Predicated region
    $region42: #{tpu_custom_call.1} parent=1 // pred_check
      _
    $region43: #{tpu_custom_call.1} parent=1 // pred_check_branch
      %667 = sbr.rel (0) target = $region45
    $region44: #{tpu_custom_call.1} parent=1 // pred_region
      %668 = dma.done [#allocation9], 128
    $region45: #{tpu_custom_call.1} parent=1 // pred_fallthru
      _
    %669 = vsyncpa [#allocation3], 1
    %670 = vsyncpa [#allocation6], 1
    %671 = vsyncpa [#allocation4], 1
    %672 = vsyncpa [#allocation9], 1

</llo_original>
